<compile_context>
chip_gen: v7x
topology: tpu7x:2x2x1
jax: 0.10.0
libtpu: 0.0.40
codegen_flags: <defaults>
</compile_context>

<pallas_src>
import functools

import jax
import jax.numpy as jnp
from jax.experimental import pallas as pl
from jax.experimental.pallas import tpu as pltpu


def _round_up(x, m):
    return (x + m - 1) // m * m


def _vmem_capacity_bytes():
    try:
        info = pltpu.get_tpu_info()
        cap = getattr(info, "vmem_capacity_bytes", None)
        if cap:
            return int(cap)
    except Exception:
        pass
    return 64 * 1024 * 1024  # conservative (v7x per-TC)


def _ffn_kernel(x_ref, gamma_ref, beta_ref,
                wg_ref, bg_ref, wv_ref, bv_ref,
                w_out_ref, b_out_ref,
                o_ref,
                xn_ref, acc_ref, *, eps, d_real, d_pad):
    """Grid: (M tiles [parallel], H tiles [arbitrary / reduction])."""
    j = pl.program_id(1)

    # LayerNorm once per row tile (j == 0); stats in f32, result stored in the
    # MXU operand dtype (bf16 by default).  Padded lanes (if any) are masked
    # out of the statistics and zeroed in xn.
    @pl.when(j == 0)
    def _():
        x = x_ref[...].astype(jnp.float32)                       # [TM, D_pad]
        inv_d = 1.0 / d_real
        mu = jnp.sum(x, axis=-1, keepdims=True) * inv_d
        diff = x - mu
        if d_real != d_pad:
            lane = jax.lax.broadcasted_iota(jnp.int32, x.shape, 1)
            diff = jnp.where(lane < d_real, diff, 0.0)
        var = jnp.sum(diff * diff, axis=-1, keepdims=True) * inv_d
        xn = diff * jax.lax.rsqrt(var + eps)
        xn = xn * gamma_ref[...].astype(jnp.float32) + beta_ref[...].astype(jnp.float32)
        xn_ref[...] = xn.astype(xn_ref.dtype)
        acc_ref[...] = jnp.zeros_like(acc_ref)

    xn = xn_ref[...]                                             # [TM, D_pad]

    # Gate / value projections for this H tile; f32 accumulation on the MXU.
    hg = jnp.dot(xn, wg_ref[...], preferred_element_type=jnp.float32) \
        + bg_ref[...].astype(jnp.float32)                        # [TM, TH]
    hv = jnp.dot(xn, wv_ref[...], preferred_element_type=jnp.float32) \
        + bv_ref[...].astype(jnp.float32)                        # [TM, TH]

    # SwiGLU in f32 (v5e has no bf16 VPU/EUP); sigmoid goes to the EUP slot.
    g = hg * jax.nn.sigmoid(hg) * hv                             # [TM, TH]

    # proj_out partial product: cast activations to the weight dtype for the
    # MXU, accumulate in the f32 VMEM scratch across H tiles.
    acc_ref[...] += jnp.dot(g.astype(w_out_ref.dtype), w_out_ref[...],
                            preferred_element_type=jnp.float32)

    @pl.when(j == pl.num_programs(1) - 1)
    def _():
        out = acc_ref[...] + b_out_ref[...].astype(jnp.float32)
        # TODO(synk): training-mode dropout via pltpu.prng_seed/prng_random_bits
        # (seed through a scalar-prefetch arg); identity in eval mode.
        o_ref[...] = out.astype(o_ref.dtype)


def feedforward(x, gamma, beta, w_in, b_in, w_out, b_out, *,
                eps=1e-5, compute_dtype=jnp.bfloat16):
    """x: [B, S, D] -> [B, S, D].

    Parameters stored already transposed ([in, out]):
      gamma/beta: [1, D]; w_in: [D, 2*H]; b_in: [1, 2*H]; w_out: [H, D]; b_out: [1, D]

    compute_dtype is the MXU operand dtype (bf16 recommended on v6e/v7x; pass
    jnp.float32 for an exact-precision path).  Accumulation is always f32.
    """
    B, S, D = x.shape
    H = w_in.shape[1] // 2
    M = B * S
    compute_dtype = jnp.dtype(compute_dtype)

    LANE = 128
    D_pad = _round_up(D, LANE)
    H_pad = _round_up(H, LANE)

    x_bytes = jnp.dtype(x.dtype).itemsize
    c_bytes = compute_dtype.itemsize

    # Sublane multiple for the token (second-minor) axis: 8 f32 / 16 bf16 / 32 int8.
    def _sub(dt):
        return max(8, 32 // jnp.dtype(dt).itemsize)
    sub = max(_sub(x.dtype), _sub(compute_dtype))

    # Generation-aware VMEM budget (v5e/v6e: 128 MiB, v7x: 64 MiB per TC).
    vmem_cap = _vmem_capacity_bytes()
    vmem_limit = int(vmem_cap * 0.75)          # headroom for compiler scratch
    budget = int(vmem_limit * 0.9)

    def _w_block_bytes(th):
        # gate + value + out weight blocks, double-buffered.
        return 2 * 3 * D_pad * th * c_bytes

    def _vmem_usage(tm, th):
        xio = 2 * tm * D_pad * x_bytes * 2                 # x in + out, double-buffered
        scratch = tm * D_pad * (c_bytes + 4)               # xn + f32 accumulator
        bias = 4 * (2 * th + 2 * D_pad) * 4                # biases / gamma / beta (overestimate)
        return xio + scratch + _w_block_bytes(th) + bias

    # Hidden-dim tile.  If all weights fit comfortably, keep TH = H so every
    # weight block index is constant and each weight is DMA'd exactly once.
    if _w_block_bytes(H_pad) <= budget // 2:
        TH = H_pad
    else:
        TH = 128
        for th_cand in (512, 256):
            if H_pad % th_cand == 0 and _vmem_usage(512, th_cand) <= budget:
                TH = th_cand
                break

    # Token-dim tile: as large as the VMEM budget allows (weight re-streaming
    # per M tile is the HBM cost; big TM pushes arithmetic intensity past the
    # ridge on all generations).
    TM = sub
    for cand in (1024, 512, 256, 128, 64, 32, 16, 8):
        if cand % sub != 0:
            continue
        if _vmem_usage(cand, TH) <= budget:
            TM = cand
            break
    if M < TM:
        TM = max(sub, _round_up(M, sub))
    M_pad = _round_up(M, TM)

    # --- Arrange operands (pad only when actually needed; no-op for aligned shapes). ---
    x2d = x.reshape(M, D)
    if M_pad != M or D_pad != D:
        x2d = jnp.pad(x2d, ((0, M_pad - M), (0, D_pad - D)))

    # One cast per call to the MXU operand dtype (no-op if weights already match).
    w_in_c = w_in.astype(compute_dtype)
    w_out_c = w_out.astype(compute_dtype)

    pad_params = (D_pad != D) or (H_pad != H)
    if pad_params:
        # Unaligned (toy) shapes: tiny pad+split copies.
        # TODO(synk): real callers should pre-pad / pre-split parameters at init time.
        gamma_p = jnp.pad(gamma, ((0, 0), (0, D_pad - D)))
        beta_p = jnp.pad(beta, ((0, 0), (0, D_pad - D)))
        w_gate = jnp.pad(w_in_c[:, :H], ((0, D_pad - D), (0, H_pad - H)))
        w_val = jnp.pad(w_in_c[:, H:], ((0, D_pad - D), (0, H_pad - H)))
        b_gate = jnp.pad(b_in[:, :H], ((0, 0), (0, H_pad - H)))
        b_val = jnp.pad(b_in[:, H:], ((0, 0), (0, H_pad - H)))
        w_out_p = jnp.pad(w_out_c, ((0, H_pad - H), (0, D_pad - D)))
        b_out_p = jnp.pad(b_out, ((0, 0), (0, D_pad - D)))
        val_off = 0
    else:
        # Aligned shapes: no wrapper slice — pass the fused [D, 2H] weight/bias
        # twice; the "value" BlockSpec indexes the second half via a block offset.
        gamma_p, beta_p = gamma, beta
        w_gate = w_val = w_in_c
        b_gate = b_val = b_in
        w_out_p, b_out_p = w_out_c, b_out
        val_off = H // TH

    grid = (M_pad // TM, H_pad // TH)

    in_specs = [
        pl.BlockSpec((TM, D_pad), lambda i, j: (i, 0)),          # x
        pl.BlockSpec((1, D_pad), lambda i, j: (0, 0)),           # gamma
        pl.BlockSpec((1, D_pad), lambda i, j: (0, 0)),           # beta
        pl.BlockSpec((D_pad, TH), lambda i, j: (0, j)),          # w_gate (first half)
        pl.BlockSpec((1, TH), lambda i, j: (0, j)),              # b_gate
        pl.BlockSpec((D_pad, TH), lambda i, j: (0, j + val_off)),  # w_val (second half)
        pl.BlockSpec((1, TH), lambda i, j: (0, j + val_off)),      # b_val
        pl.BlockSpec((TH, D_pad), lambda i, j: (j, 0)),          # w_out
        pl.BlockSpec((1, D_pad), lambda i, j: (0, 0)),           # b_out
    ]

    out2d = pl.pallas_call(
        functools.partial(_ffn_kernel, eps=eps, d_real=D, d_pad=D_pad),
        out_shape=jax.ShapeDtypeStruct((M_pad, D_pad), x.dtype),
        grid_spec=pltpu.PrefetchScalarGridSpec(
            num_scalar_prefetch=0,
            grid=grid,
            in_specs=in_specs,
            out_specs=pl.BlockSpec((TM, D_pad), lambda i, j: (i, 0)),
            scratch_shapes=[
                pltpu.VMEM((TM, D_pad), compute_dtype),  # normalized x, resident across H tiles
                pltpu.VMEM((TM, D_pad), jnp.float32),    # f32 accumulator for proj_out
            ],
        ),
        compiler_params=pltpu.CompilerParams(
            dimension_semantics=("parallel", "arbitrary"),
            vmem_limit_bytes=vmem_limit,
        ),
    )(x2d, gamma_p, beta_p, w_gate, b_gate, w_val, b_val, w_out_p, b_out_p)

    if M_pad != M or D_pad != D:
        out2d = out2d[:M, :D]
    return out2d.reshape(B, S, D)


if __name__ == "__main__":
    # Module config: dim=32, mult=4 -> hidden = 128, proj_in out = 256
    B, S, D, MULT = 2, 8, 32, 4
    H = D * MULT

    key = jax.random.PRNGKey(0)
    kx, kg, kb, kwi, kbi, kwo, kbo = jax.random.split(key, 7)

    x = jax.random.normal(kx, (B, S, D), dtype=jnp.float32)

    # Deterministic synthetic parameters (stored already transposed: [in, out]).
    gamma = jnp.ones((1, D), dtype=jnp.float32) + 0.05 * jax.random.normal(kg, (1, D))
    beta = 0.05 * jax.random.normal(kb, (1, D), dtype=jnp.float32)
    w_in = 0.05 * jax.random.normal(kwi, (D, 2 * H), dtype=jnp.float32)
    b_in = 0.05 * jax.random.normal(kbi, (1, 2 * H), dtype=jnp.float32)
    w_out = 0.05 * jax.random.normal(kwo, (H, D), dtype=jnp.float32)
    b_out = 0.05 * jax.random.normal(kbo, (1, D), dtype=jnp.float32)

    # Pure-JAX f32 reference (LayerNorm + SwiGLU FFN; dropout in eval = identity).
    mu = jnp.mean(x, axis=-1, keepdims=True)
    var = jnp.mean((x - mu) ** 2, axis=-1, keepdims=True)
    xn = (x - mu) / jnp.sqrt(var + 1e-5) * gamma[0] + beta[0]
    h = xn @ w_in + b_in[0]
    x1, x2 = h[..., :H], h[..., H:]
    ref = (jax.nn.silu(x1) * x2) @ w_out + b_out[0]

    # 1) Exact-precision path (f32 MXU operands) — tight tolerance.
    out_f32 = feedforward(x, gamma, beta, w_in, b_in, w_out, b_out,
                          compute_dtype=jnp.float32)
    jax.block_until_ready(out_f32)
    assert jnp.allclose(out_f32, ref, atol=1e-4, rtol=1e-4), "f32 path mismatch vs reference"

    # 2) Default fast path (bf16 MXU operands, f32 accumulation) — loose tolerance.
    out_bf16 = feedforward(x, gamma, beta, w_in, b_in, w_out, b_out)
    jax.block_until_ready(out_bf16)
    rel_err = jnp.max(jnp.abs(out_bf16 - ref)) / (jnp.max(jnp.abs(ref)) + 1e-6)
    assert float(rel_err) < 5e-2, f"bf16 path mismatch vs reference (rel_err={float(rel_err)})"

    print("KERNEL_OK")
</pallas_src>

<mosaic_0001>
module attributes {stable_mosaic.version = 11 : i64} {
  func.func @_ffn_kernel(%arg0: i32, %arg1: i32, %arg2: memref<16x128xf32, #tpu.memory_space<vmem>>, %arg3: memref<1x128xf32, #tpu.memory_space<vmem>>, %arg4: memref<1x128xf32, #tpu.memory_space<vmem>>, %arg5: memref<128x128xf32, #tpu.memory_space<vmem>>, %arg6: memref<1x128xf32, #tpu.memory_space<vmem>>, %arg7: memref<128x128xf32, #tpu.memory_space<vmem>>, %arg8: memref<1x128xf32, #tpu.memory_space<vmem>>, %arg9: memref<128x128xf32, #tpu.memory_space<vmem>>, %arg10: memref<1x128xf32, #tpu.memory_space<vmem>>, %arg11: memref<16x128xf32, #tpu.memory_space<vmem>>, %arg12: memref<16x128xf32, #tpu.memory_space<vmem>>, %arg13: memref<16x128xf32, #tpu.memory_space<vmem>>) attributes {dimension_semantics = [#tpu.dimension_semantics<parallel>, #tpu.dimension_semantics<arbitrary>], iteration_bounds = array<i64: 1, 1>, scalar_prefetch = 0 : i64, scratch_operands = 2 : i64, tpu.core_type = #tpu.core_type<tc>, window_params = [{transform_indices = @transform_0, window_bounds = array<i64: 16, 128>}, {pipeline_mode = #tpu.pipeline_mode<synchronous>, transform_indices = @transform_1, window_bounds = array<i64: 1, 128>}, {pipeline_mode = #tpu.pipeline_mode<synchronous>, transform_indices = @transform_2, window_bounds = array<i64: 1, 128>}, {transform_indices = @transform_3, window_bounds = array<i64: 128, 128>}, {transform_indices = @transform_4, window_bounds = array<i64: 1, 128>}, {transform_indices = @transform_5, window_bounds = array<i64: 128, 128>}, {transform_indices = @transform_6, window_bounds = array<i64: 1, 128>}, {transform_indices = @transform_7, window_bounds = array<i64: 128, 128>}, {pipeline_mode = #tpu.pipeline_mode<synchronous>, transform_indices = @transform_8, window_bounds = array<i64: 1, 128>}, {transform_indices = @transform_9, window_bounds = array<i64: 16, 128>}]} {
    %c0_i32 = arith.constant 0 : i32
    %0 = arith.cmpi eq, %arg1, %c0_i32 : i32
    %1 = arith.extui %0 : i1 to i32
    %c0_i32_0 = arith.constant 0 : i32
    %2 = arith.cmpi ne, %1, %c0_i32_0 : i32
    scf.if %2 {
      %c0_21 = arith.constant 0 : index
      %c0_22 = arith.constant 0 : index
      %29 = vector.load %arg2[%c0_21, %c0_22] : memref<16x128xf32, #tpu.memory_space<vmem>>, vector<16x128xf32>
      %cst_23 = arith.constant dense<0.000000e+00> : vector<16xf32>
      %30 = vector.multi_reduction <add>, %29, %cst_23 [1] : vector<16x128xf32> to vector<16xf32>
      %31 = vector.shape_cast %30 : vector<16xf32> to vector<16x1xf32>
      %cst_24 = arith.constant 3.125000e-02 : f32
      %32 = vector.broadcast %cst_24 : f32 to vector<16x1xf32>
      %33 = arith.mulf %31, %32 : vector<16x1xf32>
      %34 = vector.broadcast %33 : vector<16x1xf32> to vector<16x128xf32>
      %35 = arith.subf %29, %34 : vector<16x128xf32>
      %36 = tpu.iota {dimensions = array<i32: 1>} : vector<16x128xi32>
      %c32_i32 = arith.constant 32 : i32
      %37 = vector.broadcast %c32_i32 : i32 to vector<16x128xi32>
      %38 = arith.cmpi slt, %36, %37 : vector<16x128xi32>
      %cst_25 = arith.constant 0.000000e+00 : f32
      %39 = vector.broadcast %cst_25 : f32 to vector<16x128xf32>
      %40 = arith.select %38, %35, %39 : vector<16x128xi1>, vector<16x128xf32>
      %41 = arith.mulf %40, %40 : vector<16x128xf32>
      %cst_26 = arith.constant dense<0.000000e+00> : vector<16xf32>
      %42 = vector.multi_reduction <add>, %41, %cst_26 [1] : vector<16x128xf32> to vector<16xf32>
      %43 = vector.shape_cast %42 : vector<16xf32> to vector<16x1xf32>
      %cst_27 = arith.constant 3.125000e-02 : f32
      %44 = vector.broadcast %cst_27 : f32 to vector<16x1xf32>
      %45 = arith.mulf %43, %44 : vector<16x1xf32>
      %cst_28 = arith.constant 9.99999974E-6 : f32
      %46 = vector.broadcast %cst_28 : f32 to vector<16x1xf32>
      %47 = arith.addf %45, %46 : vector<16x1xf32>
      %48 = math.rsqrt %47 : vector<16x1xf32>
      %49 = vector.broadcast %48 : vector<16x1xf32> to vector<16x128xf32>
      %50 = arith.mulf %40, %49 : vector<16x128xf32>
      %c0_29 = arith.constant 0 : index
      %c0_30 = arith.constant 0 : index
      %51 = vector.load %arg3[%c0_29, %c0_30] : memref<1x128xf32, #tpu.memory_space<vmem>>, vector<1x128xf32>
      %52 = vector.broadcast %51 : vector<1x128xf32> to vector<16x128xf32>
      %53 = arith.mulf %50, %52 : vector<16x128xf32>
      %c0_31 = arith.constant 0 : index
      %c0_32 = arith.constant 0 : index
      %54 = vector.load %arg4[%c0_31, %c0_32] : memref<1x128xf32, #tpu.memory_space<vmem>>, vector<1x128xf32>
      %55 = vector.broadcast %54 : vector<1x128xf32> to vector<16x128xf32>
      %56 = arith.addf %53, %55 : vector<16x128xf32>
      %c0_33 = arith.constant 0 : index
      %c0_34 = arith.constant 0 : index
      %57 = vector.load %arg12[%c0_33, %c0_34] : memref<16x128xf32, #tpu.memory_space<vmem>>, vector<16x128xf32>
      tpu.vector_store %arg12[%c0_33, %c0_34], %56 {strides = array<i32>} : memref<16x128xf32, #tpu.memory_space<vmem>>, vector<16x128xf32>,
      %cst_35 = arith.constant 0.000000e+00 : f32
      %58 = vector.broadcast %cst_35 : f32 to vector<16x128xf32>
      %c0_36 = arith.constant 0 : index
      %c0_37 = arith.constant 0 : index
      %59 = vector.load %arg13[%c0_36, %c0_37] : memref<16x128xf32, #tpu.memory_space<vmem>>, vector<16x128xf32>
      tpu.vector_store %arg13[%c0_36, %c0_37], %58 {strides = array<i32>} : memref<16x128xf32, #tpu.memory_space<vmem>>, vector<16x128xf32>,
    } else {
    }
    %c0 = arith.constant 0 : index
    %c0_1 = arith.constant 0 : index
    %3 = vector.load %arg12[%c0, %c0_1] : memref<16x128xf32, #tpu.memory_space<vmem>>, vector<16x128xf32>
    %c0_2 = arith.constant 0 : index
    %c0_3 = arith.constant 0 : index
    %4 = vector.load %arg5[%c0_2, %c0_3] : memref<128x128xf32, #tpu.memory_space<vmem>>, vector<128x128xf32>
    %cst = arith.constant dense<0.000000e+00> : vector<16x128xf32>
    %5 = tpu.matmul %3, %4, %cst {dimension_numbers = #tpu.dot_dimension_numbers<[1], [0], [0], [1], [0, 0, 1, 1], [], []>} : vector<16x128xf32>, vector<128x128xf32>, vector<16x128xf32> -> vector<16x128xf32>
    %c0_4 = arith.constant 0 : index
    %c0_5 = arith.constant 0 : index
    %6 = vector.load %arg6[%c0_4, %c0_5] : memref<1x128xf32, #tpu.memory_space<vmem>>, vector<1x128xf32>
    %7 = vector.broadcast %6 : vector<1x128xf32> to vector<16x128xf32>
    %8 = arith.addf %5, %7 : vector<16x128xf32>
    %c0_6 = arith.constant 0 : index
    %c0_7 = arith.constant 0 : index
    %9 = vector.load %arg7[%c0_6, %c0_7] : memref<128x128xf32, #tpu.memory_space<vmem>>, vector<128x128xf32>
    %cst_8 = arith.constant dense<0.000000e+00> : vector<16x128xf32>
    %10 = tpu.matmul %3, %9, %cst_8 {dimension_numbers = #tpu.dot_dimension_numbers<[1], [0], [0], [1], [0, 0, 1, 1], [], []>} : vector<16x128xf32>, vector<128x128xf32>, vector<16x128xf32> -> vector<16x128xf32>
    %c0_9 = arith.constant 0 : index
    %c0_10 = arith.constant 0 : index
    %11 = vector.load %arg8[%c0_9, %c0_10] : memref<1x128xf32, #tpu.memory_space<vmem>>, vector<1x128xf32>
    %12 = vector.broadcast %11 : vector<1x128xf32> to vector<16x128xf32>
    %13 = arith.addf %10, %12 : vector<16x128xf32>
    %14 = arith.negf %8 : vector<16x128xf32>
    %15 = math.exp %14 : vector<16x128xf32>
    %cst_11 = arith.constant 1.000000e+00 : f32
    %16 = vector.broadcast %cst_11 : f32 to vector<16x128xf32>
    %17 = arith.addf %16, %15 : vector<16x128xf32>
    %18 = arith.divf %16, %17 : vector<16x128xf32>
    %19 = arith.mulf %8, %18 : vector<16x128xf32>
    %20 = arith.mulf %19, %13 : vector<16x128xf32>
    %c0_12 = arith.constant 0 : index
    %c0_13 = arith.constant 0 : index
    %21 = vector.load %arg13[%c0_12, %c0_13] : memref<16x128xf32, #tpu.memory_space<vmem>>, vector<16x128xf32>
    %c0_14 = arith.constant 0 : index
    %c0_15 = arith.constant 0 : index
    %22 = vector.load %arg9[%c0_14, %c0_15] : memref<128x128xf32, #tpu.memory_space<vmem>>, vector<128x128xf32>
    %cst_16 = arith.constant dense<0.000000e+00> : vector<16x128xf32>
    %23 = tpu.matmul %20, %22, %cst_16 {dimension_numbers = #tpu.dot_dimension_numbers<[1], [0], [0], [1], [0, 0, 1, 1], [], []>} : vector<16x128xf32>, vector<128x128xf32>, vector<16x128xf32> -> vector<16x128xf32>
    %24 = arith.addf %21, %23 : vector<16x128xf32>
    %c0_17 = arith.constant 0 : index
    %c0_18 = arith.constant 0 : index
    %25 = vector.load %arg13[%c0_17, %c0_18] : memref<16x128xf32, #tpu.memory_space<vmem>>, vector<16x128xf32>
    tpu.vector_store %arg13[%c0_17, %c0_18], %24 {strides = array<i32>} : memref<16x128xf32, #tpu.memory_space<vmem>>, vector<16x128xf32>,
    %c0_i32_19 = arith.constant 0 : i32
    %26 = arith.cmpi eq, %arg1, %c0_i32_19 : i32
    %27 = arith.extui %26 : i1 to i32
    %c0_i32_20 = arith.constant 0 : i32
    %28 = arith.cmpi ne, %27, %c0_i32_20 : i32
    scf.if %28 {
      %c0_21 = arith.constant 0 : index
      %c0_22 = arith.constant 0 : index
      %29 = vector.load %arg13[%c0_21, %c0_22] : memref<16x128xf32, #tpu.memory_space<vmem>>, vector<16x128xf32>
      %c0_23 = arith.constant 0 : index
      %c0_24 = arith.constant 0 : index
      %30 = vector.load %arg10[%c0_23, %c0_24] : memref<1x128xf32, #tpu.memory_space<vmem>>, vector<1x128xf32>
      %31 = vector.broadcast %30 : vector<1x128xf32> to vector<16x128xf32>
      %32 = arith.addf %29, %31 : vector<16x128xf32>
      %c0_25 = arith.constant 0 : index
      %c0_26 = arith.constant 0 : index
      %33 = vector.load %arg11[%c0_25, %c0_26] : memref<16x128xf32, #tpu.memory_space<vmem>>, vector<16x128xf32>
      tpu.vector_store %arg11[%c0_25, %c0_26], %32 {strides = array<i32>} : memref<16x128xf32, #tpu.memory_space<vmem>>, vector<16x128xf32>,
    } else {
    }
    return
  }
  func.func @transform_0(%arg0: i32, %arg1: i32) -> (i32, i32) {
    %c0_i32 = arith.constant 0 : i32
    %c0_i32_0 = arith.constant 0 : i32
    return %arg0, %c0_i32 : i32, i32
  }
  func.func @transform_1(%arg0: i32, %arg1: i32) -> (i32, i32) {
    %c0_i32 = arith.constant 0 : i32
    %c0_i32_0 = arith.constant 0 : i32
    %c0_i32_1 = arith.constant 0 : i32
    return %c0_i32, %c0_i32_0 : i32, i32
  }
  func.func @transform_2(%arg0: i32, %arg1: i32) -> (i32, i32) {
    %c0_i32 = arith.constant 0 : i32
    %c0_i32_0 = arith.constant 0 : i32
    %c0_i32_1 = arith.constant 0 : i32
    return %c0_i32, %c0_i32_0 : i32, i32
  }
  func.func @transform_3(%arg0: i32, %arg1: i32) -> (i32, i32) {
    %c0_i32 = arith.constant 0 : i32
    %c0_i32_0 = arith.constant 0 : i32
    return %c0_i32, %arg1 : i32, i32
  }
  func.func @transform_4(%arg0: i32, %arg1: i32) -> (i32, i32) {
    %c0_i32 = arith.constant 0 : i32
    %c0_i32_0 = arith.constant 0 : i32
    return %c0_i32, %arg1 : i32, i32
  }
  func.func @transform_5(%arg0: i32, %arg1: i32) -> (i32, i32) {
    %c0_i32 = arith.constant 0 : i32
    %0 = arith.addi %arg1, %c0_i32 : i32
    %c0_i32_0 = arith.constant 0 : i32
    %c0_i32_1 = arith.constant 0 : i32
    return %c0_i32_0, %0 : i32, i32
  }
  func.func @transform_6(%arg0: i32, %arg1: i32) -> (i32, i32) {
    %c0_i32 = arith.constant 0 : i32
    %0 = arith.addi %arg1, %c0_i32 : i32
    %c0_i32_0 = arith.constant 0 : i32
    %c0_i32_1 = arith.constant 0 : i32
    return %c0_i32_0, %0 : i32, i32
  }
  func.func @transform_7(%arg0: i32, %arg1: i32) -> (i32, i32) {
    %c0_i32 = arith.constant 0 : i32
    %c0_i32_0 = arith.constant 0 : i32
    return %arg1, %c0_i32 : i32, i32
  }
  func.func @transform_8(%arg0: i32, %arg1: i32) -> (i32, i32) {
    %c0_i32 = arith.constant 0 : i32
    %c0_i32_0 = arith.constant 0 : i32
    %c0_i32_1 = arith.constant 0 : i32
    return %c0_i32, %c0_i32_0 : i32, i32
  }
  func.func @transform_9(%arg0: i32, %arg1: i32) -> (i32, i32) {
    %c0_i32 = arith.constant 0 : i32
    %c0_i32_0 = arith.constant 0 : i32
    return %arg0, %c0_i32 : i32, i32
  }
}

</mosaic_0001>

<llo_original>
// kernel: tpu_custom_call.1
$region0: #{tpu_custom_call.1}
  #allocation0 [shape = 'u32[]', space=smem, size = 0x4, offset = 0x4, fixed_abs, tag = 'smem constant byte address 0x4 - core index']
  #allocation1 [shape = 'u32[144,128]{1,0:T(1,128)}', space=vmem, size = 0x12000, scoped, tag = 'internal scratch']
  #allocation2 [shape = 'f32[16,128]{1,0:T(8,128)}', space=vmem, size = 0x2000, scoped, tag = 'scratch operand']
  #allocation3 [shape = 'f32[16,128]{1,0:T(8,128)}', space=vmem, size = 0x2000, scoped, tag = 'scratch operand']
  %s0 = inlined_call_operand.hbm [shape: f32[16,128], index: 0, kind: input, shape index: {}]
  %s1 = inlined_call_operand.vmem [shape: f32[1,128], index: 1, kind: input, shape index: {}]
  %s2 = inlined_call_operand.vmem [shape: f32[1,128], index: 2, kind: input, shape index: {}]
  %s3 = inlined_call_operand.hbm [shape: f32[128,128], index: 3, kind: input, shape index: {}]
  %s4 = inlined_call_operand.vmem [shape: f32[1,128], index: 4, kind: input, shape index: {}]
  %s5 = inlined_call_operand.hbm [shape: f32[128,128], index: 5, kind: input, shape index: {}]
  %s6 = inlined_call_operand.vmem [shape: f32[1,128], index: 6, kind: input, shape index: {}]
  %s7 = inlined_call_operand.hbm [shape: f32[128,128], index: 7, kind: input, shape index: {}]
  %s8 = inlined_call_operand.vmem [shape: f32[1,128], index: 8, kind: input, shape index: {}]
  %s9 = inlined_call_operand.hbm [shape: f32[16,128], index: 9, kind: output, shape index: {}]
  %s10 = sld [smem:[#allocation0]]
  $region70: #{tpu_custom_call.1} parent=0
    _
  %s12 = ssub.s32 1, %s10
  %s13 = scalar_select 0, %s12, %s10
  $region1: #{tpu_custom_call.1} parent=0
    #allocation4 [shape = 'u8[8192]{0}', space=vmem, size = 0x2000, scoped, tag = 'input window, operand 0, single buffered']
    #allocation5 [shape = 's32[1]{0}', space=sflag, size = 0x4, scoped, tag = 'scoped memory for tpu_custom_call.1']
    #allocation6 [shape = 's32[1]{0}', space=sflag, size = 0x4, scoped, tag = 'scoped memory for tpu_custom_call.1']
    #allocation7 [shape = 'u8[65536]{0}', space=vmem, size = 0x10000, scoped, tag = 'input window, operand 3, single buffered']
    #allocation8 [shape = 's32[1]{0}', space=sflag, size = 0x4, scoped, tag = 'scoped memory for tpu_custom_call.1']
    #allocation9 [shape = 'u8[65536]{0}', space=vmem, size = 0x10000, scoped, tag = 'input window, operand 5, single buffered']
    #allocation10 [shape = 'u8[65536]{0}', space=vmem, size = 0x10000, scoped, tag = 'input window, operand 7, single buffered']
    #allocation11 [shape = 's32[1]{0}', space=sflag, size = 0x4, scoped, tag = 'scoped memory for tpu_custom_call.1']
    #allocation12 [shape = 'u8[8192]{0}', space=vmem, size = 0x2000, scoped, tag = 'output window, operand 0, single buffered']
    %14 = vsyncpa [#allocation5], 0
    %15 = vsyncpa [#allocation8], 0
    %16 = vsyncpa [#allocation11], 0
    %17 = vsyncpa [#allocation6], 0
    // Predicated region
    $region2: #{tpu_custom_call.1} parent=1 // pred_check
      _
    $region3: #{tpu_custom_call.1} parent=1 // pred_check_branch
      %19 = sbr.rel (0) target = $region5
    $region4: #{tpu_custom_call.1} parent=1 // pred_region
      %s21 = ssub.s32 256, 256
      %22 = vsyncadd [#allocation5], %s21
      %s23 = sshll.u32 [#allocation4], 4
      %s24 = int_to_ptr.vmem [resolvable:$true] %s23
      %29 = dma.hbm_to_vmem [thread:$0]  %s0, 256, %s24, [#allocation5], 128, 128, 8
    $region5: #{tpu_custom_call.1} parent=1 // pred_fallthru
      _
    // Predicated region
    $region6: #{tpu_custom_call.1} parent=1 // pred_check
      _
    $region7: #{tpu_custom_call.1} parent=1 // pred_check_branch
      %31 = sbr.rel (0) target = $region9
    $region8: #{tpu_custom_call.1} parent=1 // pred_region
      _
    $region9: #{tpu_custom_call.1} parent=1 // pred_fallthru
      _
    // Predicated region
    $region10: #{tpu_custom_call.1} parent=1 // pred_check
      _
    $region11: #{tpu_custom_call.1} parent=1 // pred_check_branch
      %33 = sbr.rel (0) target = $region13
    $region12: #{tpu_custom_call.1} parent=1 // pred_region
      _
    $region13: #{tpu_custom_call.1} parent=1 // pred_fallthru
      _
    // Predicated region
    $region14: #{tpu_custom_call.1} parent=1 // pred_check
      _
    $region15: #{tpu_custom_call.1} parent=1 // pred_check_branch
      %35 = sbr.rel (0) target = $region17
    $region16: #{tpu_custom_call.1} parent=1 // pred_region
      %s37 = ssub.s32 2048, 2048
      %38 = vsyncadd [#allocation8], %s37
      %s39 = sshll.u32 [#allocation7], 4
      %s40 = int_to_ptr.vmem [resolvable:$true] %s39
      %45 = dma.hbm_to_vmem [thread:$0]  %s3, 2048, %s40, [#allocation8], 128, 128, 8
    $region17: #{tpu_custom_call.1} parent=1 // pred_fallthru
      _
    // Predicated region
    $region18: #{tpu_custom_call.1} parent=1 // pred_check
      _
    $region19: #{tpu_custom_call.1} parent=1 // pred_check_branch
      %47 = sbr.rel (0) target = $region21
    $region20: #{tpu_custom_call.1} parent=1 // pred_region
      _
    $region21: #{tpu_custom_call.1} parent=1 // pred_fallthru
      _
    // Predicated region
    $region22: #{tpu_custom_call.1} parent=1 // pred_check
      _
    $region23: #{tpu_custom_call.1} parent=1 // pred_check_branch
      %49 = sbr.rel (0) target = $region25
    $region24: #{tpu_custom_call.1} parent=1 // pred_region
      %s51 = ssub.s32 2048, 2048
      %52 = vsyncadd [#allocation8], %s51
      %s53 = sshll.u32 [#allocation9], 4
      %s54 = int_to_ptr.vmem [resolvable:$true] %s53
      %59 = dma.hbm_to_vmem [thread:$0]  %s5, 2048, %s54, [#allocation8], 128, 128, 8
    $region25: #{tpu_custom_call.1} parent=1 // pred_fallthru
      _
    // Predicated region
    $region26: #{tpu_custom_call.1} parent=1 // pred_check
      _
    $region27: #{tpu_custom_call.1} parent=1 // pred_check_branch
      %61 = sbr.rel (0) target = $region29
    $region28: #{tpu_custom_call.1} parent=1 // pred_region
      _
    $region29: #{tpu_custom_call.1} parent=1 // pred_fallthru
      _
    // Predicated region
    $region30: #{tpu_custom_call.1} parent=1 // pred_check
      _
    $region31: #{tpu_custom_call.1} parent=1 // pred_check_branch
      %63 = sbr.rel (0) target = $region33
    $region32: #{tpu_custom_call.1} parent=1 // pred_region
      %s65 = ssub.s32 2048, 2048
      %66 = vsyncadd [#allocation11], %s65
      %s67 = sshll.u32 [#allocation10], 4
      %s68 = int_to_ptr.vmem [resolvable:$true] %s67
      %73 = dma.hbm_to_vmem [thread:$0]  %s7, 2048, %s68, [#allocation11], 128, 128, 8
    $region33: #{tpu_custom_call.1} parent=1 // pred_fallthru
      _
    // Predicated region
    $region34: #{tpu_custom_call.1} parent=1 // pred_check
      _
    $region35: #{tpu_custom_call.1} parent=1 // pred_check_branch
      %75 = sbr.rel (0) target = $region37
    $region36: #{tpu_custom_call.1} parent=1 // pred_region
      _
    $region37: #{tpu_custom_call.1} parent=1 // pred_fallthru
      _
    // Predicated region
    $region38: #{tpu_custom_call.1} parent=1 // pred_check
      _
    $region39: #{tpu_custom_call.1} parent=1 // pred_check_branch
      %77 = sbr.rel (0) target = $region41
    $region40: #{tpu_custom_call.1} parent=1 // pred_region
      %78 = dma.done [#allocation5], 256
    $region41: #{tpu_custom_call.1} parent=1 // pred_fallthru
      _
    // Predicated region
    $region42: #{tpu_custom_call.1} parent=1 // pred_check
      _
    $region43: #{tpu_custom_call.1} parent=1 // pred_check_branch
      %80 = sbr.rel (0) target = $region45
    $region44: #{tpu_custom_call.1} parent=1 // pred_region
      %81 = dma.done [#allocation8], 2048
    $region45: #{tpu_custom_call.1} parent=1 // pred_fallthru
      _
    // Predicated region
    $region46: #{tpu_custom_call.1} parent=1 // pred_check
      _
    $region47: #{tpu_custom_call.1} parent=1 // pred_check_branch
      %83 = sbr.rel (0) target = $region49
    $region48: #{tpu_custom_call.1} parent=1 // pred_region
      %84 = dma.done [#allocation8], 2048
    $region49: #{tpu_custom_call.1} parent=1 // pred_fallthru
      _
    // Predicated region
    $region50: #{tpu_custom_call.1} parent=1 // pred_check
      _
    $region51: #{tpu_custom_call.1} parent=1 // pred_check_branch
      %86 = sbr.rel (0) target = $region53
    $region52: #{tpu_custom_call.1} parent=1 // pred_region
      %87 = dma.done [#allocation11], 2048
    $region53: #{tpu_custom_call.1} parent=1 // pred_fallthru
      _
    %p88 = scmp.eq.s32.totalorder 0, 0
    // Predicated region
    $region54: #{tpu_custom_call.1} parent=1 // pred_check
      %p89 = pneg %p88
    $region55: #{tpu_custom_call.1} parent=1 // pred_check_branch
      %91 = sbr.rel (%p89) target = $region57
    $region56: #{tpu_custom_call.1} parent=1 // pred_region
      %v92 = vld [vmem:[#allocation4] sm:$0xff]
      %v93 = vld [vmem:[#allocation4 + $0x8] sm:$0xff]
      %94 = vadd.xlane.f32.xlu0 %v92
      %v95 = vpop.xlane.xlu0 %94
      %96 = vadd.xlane.f32.xlu0 %v93
      %v97 = vpop.xlane.xlu0 %96
      %v98 = vmul.f32 %v95, 0.03125
      %v99 = vmul.f32 %v97, 0.03125
      %v100 = vsub.f32 %v92, %v98
      %v101 = vsub.f32 %v93, %v99
      %v102 = vlaneseq
      %v103 = vand.u32 %v102, 127
      %vm104 = vcmp.lt.s32.totalorder %v103, 32
      %v105 = vsel %vm104, %v100, 0.0
      %v106 = vsel %vm104, %v101, 0.0
      %v107 = vmul.f32 %v105, %v105
      %v108 = vmul.f32 %v106, %v106
      %109 = vadd.xlane.f32.xlu0 %v107
      %v110 = vpop.xlane.xlu0 %109
      %111 = vadd.xlane.f32.xlu0 %v108
      %v112 = vpop.xlane.xlu0 %111
      %v113 = vmul.f32 %v110, 0.03125
      %v114 = vmul.f32 %v112, 0.03125
      %v115 = vadd.f32 %v113, 1e-05
      %v116 = vadd.f32 %v114, 1e-05
      %v117 = vrsqrt.pop %v115
      %v118 = vrsqrt.pop %v116
      %v119 = vmul.f32 %v105, %v117
      %v120 = vmul.f32 %v106, %v118
      %v121 = vld [vmem:[%s1] sm:$0x1]
      %v123 = vlaneseq
      %v124 = vshrl.u32 %v123, 7
      %v125 = vsub.s32 0, %v124
      %v126 = vrot.slane %v121, %v125
      %v128 = vmul.f32 %v119, %v126
      %v129 = vmul.f32 %v120, %v126
      %v130 = vld [vmem:[%s2] sm:$0x1]
      %v132 = vlaneseq
      %v133 = vshrl.u32 %v132, 7
      %v134 = vsub.s32 0, %v133
      %v135 = vrot.slane %v130, %v134
      %v137 = vadd.f32 %v128, %v135
      %v138 = vadd.f32 %v129, %v135
      %139 = vst [vmem:[#allocation2] sm:$0xff] %v137
      %140 = vst [vmem:[#allocation2 + $0x8] sm:$0xff] %v138
      %141 = vst [vmem:[#allocation3] sm:$0xff] 0.0
      %142 = vst [vmem:[#allocation3 + $0x8] sm:$0xff] 0.0
    $region57: #{tpu_custom_call.1} parent=1 // pred_fallthru
      _
    %v143 = vld [vmem:[#allocation2] sm:$0xff]
    %v144 = vld [vmem:[#allocation2 + $0x8] sm:$0xff]
    %v145 = vld [vmem:[#allocation7] sm:$0xff]
    %v146 = vld [vmem:[#allocation7 + $0x8] sm:$0xff]
    %v147 = vld [vmem:[#allocation7 + $0x10] sm:$0xff]
    %v148 = vld [vmem:[#allocation7 + $0x18] sm:$0xff]
    %v149 = vld [vmem:[#allocation7 + $0x20] sm:$0xff]
    %v150 = vld [vmem:[#allocation7 + $0x28] sm:$0xff]
    %v151 = vld [vmem:[#allocation7 + $0x30] sm:$0xff]
    %v152 = vld [vmem:[#allocation7 + $0x38] sm:$0xff]
    %v153 = vld [vmem:[#allocation7 + $0x40] sm:$0xff]
    %v154 = vld [vmem:[#allocation7 + $0x48] sm:$0xff]
    %v155 = vld [vmem:[#allocation7 + $0x50] sm:$0xff]
    %v156 = vld [vmem:[#allocation7 + $0x58] sm:$0xff]
    %v157 = vld [vmem:[#allocation7 + $0x60] sm:$0xff]
    %v158 = vld [vmem:[#allocation7 + $0x68] sm:$0xff]
    %v159 = vld [vmem:[#allocation7 + $0x70] sm:$0xff]
    %v160 = vld [vmem:[#allocation7 + $0x78] sm:$0xff]
    %v161 = vld [vmem:[%s4] sm:$0x1]
    %v163 = vlaneseq
    %v164 = vshrl.u32 %v163, 7
    %v165 = vsub.s32 0, %v164
    %v166 = vrot.slane %v161, %v165
    %168 = vmatprep.subr.mxu0 0.0
    %169 = vmatpush1.msra.mxu0 %v145
    %170 = vmatprep.subr.mxu0 0.0
    %171 = vmatpush1.msra.mxu0 %v146
    %172 = vmatprep.subr.mxu0 0.0
    %173 = vmatpush1.msra.mxu0 %v147
    %174 = vmatprep.subr.mxu0 0.0
    %175 = vmatpush1.msra.mxu0 %v148
    %176 = vmatprep.subr.mxu0 0.0
    %177 = vmatpush1.msra.mxu0 %v149
    %178 = vmatprep.subr.mxu0 0.0
    %179 = vmatpush1.msra.mxu0 %v150
    %180 = vmatprep.subr.mxu0 0.0
    %181 = vmatpush1.msra.mxu0 %v151
    %182 = vmatprep.subr.mxu0 0.0
    %183 = vmatpush1.msra.mxu0 %v152
    %184 = vmatprep.subr.mxu0 0.0
    %185 = vmatpush1.msra.mxu0 %v153
    %186 = vmatprep.subr.mxu0 0.0
    %187 = vmatpush1.msra.mxu0 %v154
    %188 = vmatprep.subr.mxu0 0.0
    %189 = vmatpush1.msra.mxu0 %v155
    %190 = vmatprep.subr.mxu0 0.0
    %191 = vmatpush1.msra.mxu0 %v156
    %192 = vmatprep.subr.mxu0 0.0
    %193 = vmatpush1.msra.mxu0 %v157
    %194 = vmatprep.subr.mxu0 0.0
    %195 = vmatpush1.msra.mxu0 %v158
    %196 = vmatprep.subr.mxu0 0.0
    %197 = vmatpush1.msra.mxu0 %v159
    %198 = vmatprep.subr.mxu0 0.0
    %199 = vmatpush1.msra.mxu0 %v160
    %200 = vmatprep.subr.mxu0 0.0
    %201 = vmatpush1.msra.mxu0 0.0
    %202 = vmatprep.subr.mxu0 0.0
    %203 = vmatpush1.msra.mxu0 0.0
    %204 = vmatprep.subr.mxu0 0.0
    %205 = vmatpush1.msra.mxu0 0.0
    %206 = vmatprep.subr.mxu0 0.0
    %207 = vmatpush1.msra.mxu0 0.0
    %208 = vmatprep.subr.mxu0 0.0
    %209 = vmatpush1.msra.mxu0 0.0
    %210 = vmatprep.subr.mxu0 0.0
    %211 = vmatpush1.msra.mxu0 0.0
    %212 = vmatprep.subr.mxu0 0.0
    %213 = vmatpush1.msra.mxu0 0.0
    %214 = vmatprep.subr.mxu0 0.0
    %215 = vmatpush1.msra.mxu0 0.0
    %216 = vmatprep.subr.mxu0 0.0
    %217 = vmatpush1.msra.mxu0 0.0
    %218 = vmatprep.subr.mxu0 0.0
    %219 = vmatpush1.msra.mxu0 0.0
    %220 = vmatprep.subr.mxu0 0.0
    %221 = vmatpush1.msra.mxu0 0.0
    %222 = vmatprep.subr.mxu0 0.0
    %223 = vmatpush1.msra.mxu0 0.0
    %224 = vmatprep.subr.mxu0 0.0
    %225 = vmatpush1.msra.mxu0 0.0
    %226 = vmatprep.subr.mxu0 0.0
    %227 = vmatpush1.msra.mxu0 0.0
    %228 = vmatprep.subr.mxu0 0.0
    %229 = vmatpush1.msra.mxu0 0.0
    %230 = vmatprep.subr.mxu0 0.0
    %231 = vmatpush1.msra.mxu0 0.0
    %232 = vmatprep.mubr.f32.mxu0 0.0
    %233 = vmatmul.mubr.f32.gmra.mrb[0].mxu0 %v143
    %v234 = vpop.f32.mrb[0].mxu0
    %v235 = vadd.f32 %v166, %v234
    %v236 = vpop.f32.mrb[0].mxu0
    %237 = vmatprep.mubr.f32.mxu0 0.0
    %238 = vmatmul.mubr.f32.gmra.mrb[0].mxu0 %v144
    %v239 = vpop.f32.mrb[0].mxu0
    %v240 = vadd.f32 %v166, %v239
    %v241 = vpop.f32.mrb[0].mxu0
    %242 = vdwg.mxu0
    %v243 = vld [vmem:[#allocation9] sm:$0xff]
    %v244 = vld [vmem:[#allocation9 + $0x8] sm:$0xff]
    %v245 = vld [vmem:[#allocation9 + $0x10] sm:$0xff]
    %v246 = vld [vmem:[#allocation9 + $0x18] sm:$0xff]
    %v247 = vld [vmem:[#allocation9 + $0x20] sm:$0xff]
    %v248 = vld [vmem:[#allocation9 + $0x28] sm:$0xff]
    %v249 = vld [vmem:[#allocation9 + $0x30] sm:$0xff]
    %v250 = vld [vmem:[#allocation9 + $0x38] sm:$0xff]
    %v251 = vld [vmem:[#allocation9 + $0x40] sm:$0xff]
    %v252 = vld [vmem:[#allocation9 + $0x48] sm:$0xff]
    %v253 = vld [vmem:[#allocation9 + $0x50] sm:$0xff]
    %v254 = vld [vmem:[#allocation9 + $0x58] sm:$0xff]
    %v255 = vld [vmem:[#allocation9 + $0x60] sm:$0xff]
    %v256 = vld [vmem:[#allocation9 + $0x68] sm:$0xff]
    %v257 = vld [vmem:[#allocation9 + $0x70] sm:$0xff]
    %v258 = vld [vmem:[#allocation9 + $0x78] sm:$0xff]
    %v259 = vld [vmem:[%s6] sm:$0x1]
    %v261 = vlaneseq
    %v262 = vshrl.u32 %v261, 7
    %v263 = vsub.s32 0, %v262
    %v264 = vrot.slane %v259, %v263
    %266 = vmatprep.subr.mxu0 0.0
    %267 = vmatpush1.msra.mxu0 %v243
    %268 = vmatprep.subr.mxu0 0.0
    %269 = vmatpush1.msra.mxu0 %v244
    %270 = vmatprep.subr.mxu0 0.0
    %271 = vmatpush1.msra.mxu0 %v245
    %272 = vmatprep.subr.mxu0 0.0
    %273 = vmatpush1.msra.mxu0 %v246
    %274 = vmatprep.subr.mxu0 0.0
    %275 = vmatpush1.msra.mxu0 %v247
    %276 = vmatprep.subr.mxu0 0.0
    %277 = vmatpush1.msra.mxu0 %v248
    %278 = vmatprep.subr.mxu0 0.0
    %279 = vmatpush1.msra.mxu0 %v249
    %280 = vmatprep.subr.mxu0 0.0
    %281 = vmatpush1.msra.mxu0 %v250
    %282 = vmatprep.subr.mxu0 0.0
    %283 = vmatpush1.msra.mxu0 %v251
    %284 = vmatprep.subr.mxu0 0.0
    %285 = vmatpush1.msra.mxu0 %v252
    %286 = vmatprep.subr.mxu0 0.0
    %287 = vmatpush1.msra.mxu0 %v253
    %288 = vmatprep.subr.mxu0 0.0
    %289 = vmatpush1.msra.mxu0 %v254
    %290 = vmatprep.subr.mxu0 0.0
    %291 = vmatpush1.msra.mxu0 %v255
    %292 = vmatprep.subr.mxu0 0.0
    %293 = vmatpush1.msra.mxu0 %v256
    %294 = vmatprep.subr.mxu0 0.0
    %295 = vmatpush1.msra.mxu0 %v257
    %296 = vmatprep.subr.mxu0 0.0
    %297 = vmatpush1.msra.mxu0 %v258
    %298 = vmatprep.subr.mxu0 0.0
    %299 = vmatpush1.msra.mxu0 0.0
    %300 = vmatprep.subr.mxu0 0.0
    %301 = vmatpush1.msra.mxu0 0.0
    %302 = vmatprep.subr.mxu0 0.0
    %303 = vmatpush1.msra.mxu0 0.0
    %304 = vmatprep.subr.mxu0 0.0
    %305 = vmatpush1.msra.mxu0 0.0
    %306 = vmatprep.subr.mxu0 0.0
    %307 = vmatpush1.msra.mxu0 0.0
    %308 = vmatprep.subr.mxu0 0.0
    %309 = vmatpush1.msra.mxu0 0.0
    %310 = vmatprep.subr.mxu0 0.0
    %311 = vmatpush1.msra.mxu0 0.0
    %312 = vmatprep.subr.mxu0 0.0
    %313 = vmatpush1.msra.mxu0 0.0
    %314 = vmatprep.subr.mxu0 0.0
    %315 = vmatpush1.msra.mxu0 0.0
    %316 = vmatprep.subr.mxu0 0.0
    %317 = vmatpush1.msra.mxu0 0.0
    %318 = vmatprep.subr.mxu0 0.0
    %319 = vmatpush1.msra.mxu0 0.0
    %320 = vmatprep.subr.mxu0 0.0
    %321 = vmatpush1.msra.mxu0 0.0
    %322 = vmatprep.subr.mxu0 0.0
    %323 = vmatpush1.msra.mxu0 0.0
    %324 = vmatprep.subr.mxu0 0.0
    %325 = vmatpush1.msra.mxu0 0.0
    %326 = vmatprep.subr.mxu0 0.0
    %327 = vmatpush1.msra.mxu0 0.0
    %328 = vmatprep.subr.mxu0 0.0
    %329 = vmatpush1.msra.mxu0 0.0
    %330 = vmatprep.mubr.f32.mxu0 0.0
    %331 = vmatmul.mubr.f32.gmra.mrb[0].mxu0 %v143
    %v332 = vpop.f32.mrb[0].mxu0
    %v333 = vadd.f32 %v264, %v332
    %v334 = vpop.f32.mrb[0].mxu0
    %335 = vmatprep.mubr.f32.mxu0 0.0
    %336 = vmatmul.mubr.f32.gmra.mrb[0].mxu0 %v144
    %v337 = vpop.f32.mrb[0].mxu0
    %v338 = vadd.f32 %v264, %v337
    %v339 = vpop.f32.mrb[0].mxu0
    %340 = vdwg.mxu0
    %v341 = vxor.u32 %v235, 2147483648
    %v342 = vxor.u32 %v240, 2147483648
    %v343 = vmul.f32 %v341, 1.442695
    %v344 = vpow.pop %v343
    %v345 = vmul.f32 %v342, 1.442695
    %v346 = vpow.pop %v345
    %v347 = vadd.f32 %v344, 1.0
    %v348 = vadd.f32 %v346, 1.0
    %v349 = vrcp.pop %v347
    %v350 = vmul.f32 1.0, %v349
    %v351 = vrcp.pop %v348
    %v352 = vmul.f32 1.0, %v351
    %v353 = vmul.f32 %v235, %v350
    %v354 = vmul.f32 %v240, %v352
    %v355 = vmul.f32 %v353, %v333
    %v356 = vmul.f32 %v354, %v338
    %v357 = vld [vmem:[#allocation3] sm:$0xff]
    %v358 = vld [vmem:[#allocation3 + $0x8] sm:$0xff]
    %v359 = vld [vmem:[#allocation10] sm:$0xff]
    %v360 = vld [vmem:[#allocation10 + $0x8] sm:$0xff]
    %v361 = vld [vmem:[#allocation10 + $0x10] sm:$0xff]
    %v362 = vld [vmem:[#allocation10 + $0x18] sm:$0xff]
    %v363 = vld [vmem:[#allocation10 + $0x20] sm:$0xff]
    %v364 = vld [vmem:[#allocation10 + $0x28] sm:$0xff]
    %v365 = vld [vmem:[#allocation10 + $0x30] sm:$0xff]
    %v366 = vld [vmem:[#allocation10 + $0x38] sm:$0xff]
    %v367 = vld [vmem:[#allocation10 + $0x40] sm:$0xff]
    %v368 = vld [vmem:[#allocation10 + $0x48] sm:$0xff]
    %v369 = vld [vmem:[#allocation10 + $0x50] sm:$0xff]
    %v370 = vld [vmem:[#allocation10 + $0x58] sm:$0xff]
    %v371 = vld [vmem:[#allocation10 + $0x60] sm:$0xff]
    %v372 = vld [vmem:[#allocation10 + $0x68] sm:$0xff]
    %v373 = vld [vmem:[#allocation10 + $0x70] sm:$0xff]
    %v374 = vld [vmem:[#allocation10 + $0x78] sm:$0xff]
    %375 = vmatprep.subr.mxu0 0.0
    %376 = vmatpush1.msra.mxu0 %v359
    %377 = vmatprep.subr.mxu0 0.0
    %378 = vmatpush1.msra.mxu0 %v360
    %379 = vmatprep.subr.mxu0 0.0
    %380 = vmatpush1.msra.mxu0 %v361
    %381 = vmatprep.subr.mxu0 0.0
    %382 = vmatpush1.msra.mxu0 %v362
    %383 = vmatprep.subr.mxu0 0.0
    %384 = vmatpush1.msra.mxu0 %v363
    %385 = vmatprep.subr.mxu0 0.0
    %386 = vmatpush1.msra.mxu0 %v364
    %387 = vmatprep.subr.mxu0 0.0
    %388 = vmatpush1.msra.mxu0 %v365
    %389 = vmatprep.subr.mxu0 0.0
    %390 = vmatpush1.msra.mxu0 %v366
    %391 = vmatprep.subr.mxu0 0.0
    %392 = vmatpush1.msra.mxu0 %v367
    %393 = vmatprep.subr.mxu0 0.0
    %394 = vmatpush1.msra.mxu0 %v368
    %395 = vmatprep.subr.mxu0 0.0
    %396 = vmatpush1.msra.mxu0 %v369
    %397 = vmatprep.subr.mxu0 0.0
    %398 = vmatpush1.msra.mxu0 %v370
    %399 = vmatprep.subr.mxu0 0.0
    %400 = vmatpush1.msra.mxu0 %v371
    %401 = vmatprep.subr.mxu0 0.0
    %402 = vmatpush1.msra.mxu0 %v372
    %403 = vmatprep.subr.mxu0 0.0
    %404 = vmatpush1.msra.mxu0 %v373
    %405 = vmatprep.subr.mxu0 0.0
    %406 = vmatpush1.msra.mxu0 %v374
    %407 = vmatprep.subr.mxu0 0.0
    %408 = vmatpush1.msra.mxu0 0.0
    %409 = vmatprep.subr.mxu0 0.0
    %410 = vmatpush1.msra.mxu0 0.0
    %411 = vmatprep.subr.mxu0 0.0
    %412 = vmatpush1.msra.mxu0 0.0
    %413 = vmatprep.subr.mxu0 0.0
    %414 = vmatpush1.msra.mxu0 0.0
    %415 = vmatprep.subr.mxu0 0.0
    %416 = vmatpush1.msra.mxu0 0.0
    %417 = vmatprep.subr.mxu0 0.0
    %418 = vmatpush1.msra.mxu0 0.0
    %419 = vmatprep.subr.mxu0 0.0
    %420 = vmatpush1.msra.mxu0 0.0
    %421 = vmatprep.subr.mxu0 0.0
    %422 = vmatpush1.msra.mxu0 0.0
    %423 = vmatprep.subr.mxu0 0.0
    %424 = vmatpush1.msra.mxu0 0.0
    %425 = vmatprep.subr.mxu0 0.0
    %426 = vmatpush1.msra.mxu0 0.0
    %427 = vmatprep.subr.mxu0 0.0
    %428 = vmatpush1.msra.mxu0 0.0
    %429 = vmatprep.subr.mxu0 0.0
    %430 = vmatpush1.msra.mxu0 0.0
    %431 = vmatprep.subr.mxu0 0.0
    %432 = vmatpush1.msra.mxu0 0.0
    %433 = vmatprep.subr.mxu0 0.0
    %434 = vmatpush1.msra.mxu0 0.0
    %435 = vmatprep.subr.mxu0 0.0
    %436 = vmatpush1.msra.mxu0 0.0
    %437 = vmatprep.subr.mxu0 0.0
    %438 = vmatpush1.msra.mxu0 0.0
    %439 = vmatprep.mubr.f32.mxu0 0.0
    %440 = vmatmul.mubr.f32.gmra.mrb[0].mxu0 %v355
    %v441 = vpop.f32.mrb[0].mxu0
    %v442 = vadd.f32 0.0, %v441
    %v443 = vpop.f32.mrb[0].mxu0
    %444 = vmatprep.mubr.f32.mxu0 0.0
    %445 = vmatmul.mubr.f32.gmra.mrb[0].mxu0 %v356
    %v446 = vpop.f32.mrb[0].mxu0
    %v447 = vadd.f32 0.0, %v446
    %v448 = vpop.f32.mrb[0].mxu0
    %449 = vdwg.mxu0
    %v450 = vadd.f32 %v357, %v442
    %v451 = vadd.f32 %v358, %v447
    %452 = vst [vmem:[#allocation3] sm:$0xff] %v450
    %453 = vst [vmem:[#allocation3 + $0x8] sm:$0xff] %v451
    // Predicated region
    $region58: #{tpu_custom_call.1} parent=1 // pred_check
      %p454 = pneg %p88
    $region59: #{tpu_custom_call.1} parent=1 // pred_check_branch
      %456 = sbr.rel (%p454) target = $region61
    $region60: #{tpu_custom_call.1} parent=1 // pred_region
      %v457 = vld [vmem:[#allocation3] sm:$0xff]
      %v458 = vld [vmem:[#allocation3 + $0x8] sm:$0xff]
      %v459 = vld [vmem:[%s8] sm:$0x1]
      %v461 = vlaneseq
      %v462 = vshrl.u32 %v461, 7
      %v463 = vsub.s32 0, %v462
      %v464 = vrot.slane %v459, %v463
      %v466 = vadd.f32 %v457, %v464
      %v467 = vadd.f32 %v458, %v464
      %468 = vst [vmem:[#allocation12] sm:$0xff] %v466
      %469 = vst [vmem:[#allocation12 + $0x8] sm:$0xff] %v467
    $region61: #{tpu_custom_call.1} parent=1 // pred_fallthru
      _
    // Predicated region
    $region62: #{tpu_custom_call.1} parent=1 // pred_check
      _
    $region63: #{tpu_custom_call.1} parent=1 // pred_check_branch
      %471 = sbr.rel (0) target = $region65
    $region64: #{tpu_custom_call.1} parent=1 // pred_region
      %s473 = ssub.s32 256, 256
      %474 = vsyncadd [#allocation6], %s473
      %s475 = sshll.u32 [#allocation12], 4
      %s476 = int_to_ptr.vmem [resolvable:$true] %s475
      %481 = dma.vmem_to_hbm [thread:$0]  %s476, 256, %s9, [#allocation6], 128, 128, 8
    $region65: #{tpu_custom_call.1} parent=1 // pred_fallthru
      _
    // Predicated region
    $region66: #{tpu_custom_call.1} parent=1 // pred_check
      _
    $region67: #{tpu_custom_call.1} parent=1 // pred_check_branch
      %483 = sbr.rel (0) target = $region69
    $region68: #{tpu_custom_call.1} parent=1 // pred_region
      %484 = dma.done [#allocation6], 256
    $region69: #{tpu_custom_call.1} parent=1 // pred_fallthru
      _
    %485 = vsyncpa [#allocation5], 1
    %486 = vsyncpa [#allocation8], 1
    %487 = vsyncpa [#allocation11], 1
    %488 = vsyncpa [#allocation6], 1

</llo_original>
